<compile_context>
chip_gen: v7x
topology: tpu7x:2x2x1
jax: 0.10.0
libtpu: 0.0.40
codegen_flags: <defaults>
</compile_context>

<pallas_src>
import math
import functools

import jax
import jax.numpy as jnp
from jax import lax
from jax.experimental import pallas as pl
from jax.experimental.pallas import tpu as pltpu

_LANE = 128
_ACC_ROWS = 32                    # resident accumulator rows per split (4 vreg chains)
_BLOCK_BYTES = 2 * 1024 * 1024    # ~2 MiB (native dtype) per input per grid step
_VMEM_LIMIT = 32 * 1024 * 1024    # explicit scoped-VMEM request (safe on v5e..v7x)


def _num_core_splits():
    """2-way core split only on multi-TensorCore chips (v7x)."""
    # TODO(synk): verify in an xprof trace that CORE_PARALLEL runs both v7x TCs.
    try:
        kind = jax.devices()[0].device_kind.lower()
    except Exception:
        return 1
    return 2 if ("v7" in kind or "7x" in kind) else 1


# ------------------------- static tiling plan -------------------------

def _budget_rows(itemsize):
    r = _BLOCK_BYTES // (_LANE * itemsize)
    return max(_ACC_ROWS, (r // _ACC_ROWS) * _ACC_ROWS)


def _plan_blocks(rows, itemsize):
    """Pick block_rows / n_blocks for a (rows, 128) slab."""
    budget = _budget_rows(itemsize)
    if rows <= budget:
        # Single full-dim block (always legal even if not (8,128)-aligned).
        block_rows = rows
    else:
        block_rows = budget          # multiple of 32 -> aligned for any dtype
    n_blocks = -(-rows // block_rows)
    return block_rows, n_blocks


def _make_in_index_map(blocks_per_split, n_blocks):
    def index_map(p, j):
        b = p * blocks_per_split + j
        # Clamp overflow blocks (uneven split); they are fully row-masked in-kernel.
        return (jnp.minimum(b, n_blocks - 1), 0)
    return index_map


# ------------------------- kernel helpers -------------------------

def _accumulate(o_ref, vals, block_rows, out_base=0):
    """Fold (block_rows,128) f32 into the resident (_ACC_ROWS,128) accumulator."""
    if block_rows % _ACC_ROWS == 0:
        o_ref[out_base:out_base + _ACC_ROWS, :] += vals.reshape(
            block_rows // _ACC_ROWS, _ACC_ROWS, _LANE).sum(axis=0)
    else:
        # Tiny full-dim blocks only (rows < accumulator alignment).
        o_ref[out_base:out_base + 1, :] += jnp.sum(vals, axis=0, keepdims=True)


# ------------------------- squared-difference kernel -------------------------

def _make_sq_diff_kernel(block_rows, blocks_per_split, valid_rows, need_mask):
    def compute(x_ref, y_ref, o_ref, mask):
        d = x_ref[...].astype(jnp.float32) - y_ref[...].astype(jnp.float32)
        if mask is not None:
            d = jnp.where(mask, d, 0.0)
        _accumulate(o_ref, d * d, block_rows)

    def kernel(x_ref, y_ref, o_ref):
        p = pl.program_id(0)
        j = pl.program_id(1)

        @pl.when(j == 0)
        def _():
            o_ref[...] = jnp.zeros_like(o_ref)

        if not need_mask:
            compute(x_ref, y_ref, o_ref, None)
        else:
            start = (p * blocks_per_split + j) * block_rows
            ragged = start + block_rows > valid_rows

            @pl.when(jnp.logical_not(ragged))
            def _():
                compute(x_ref, y_ref, o_ref, None)          # fast path

            @pl.when(ragged)
            def _():
                row = lax.broadcasted_iota(jnp.int32, (block_rows, _LANE), 0)
                compute(x_ref, y_ref, o_ref, row + start < valid_rows)

    return kernel


def _sum_sq_diff_slab(x_slab, y_slab):
    rows = x_slab.shape[0]
    itemsize = max(x_slab.dtype.itemsize, y_slab.dtype.itemsize)
    block_rows, n_blocks = _plan_blocks(rows, itemsize)
    splits = _num_core_splits() if n_blocks > 1 else 1
    bps = -(-n_blocks // splits)
    need_mask = (rows != n_blocks * block_rows) or (n_blocks != bps * splits)

    kernel = _make_sq_diff_kernel(block_rows, bps, rows, need_mask)
    in_map = _make_in_index_map(bps, n_blocks)
    lead_sem = pltpu.CORE_PARALLEL if splits > 1 else pltpu.ARBITRARY

    out = pl.pallas_call(
        kernel,
        out_shape=jax.ShapeDtypeStruct((splits * _ACC_ROWS, _LANE), jnp.float32),
        grid_spec=pltpu.PrefetchScalarGridSpec(
            num_scalar_prefetch=0,
            grid=(splits, bps),
            in_specs=[pl.BlockSpec((block_rows, _LANE), in_map),
                      pl.BlockSpec((block_rows, _LANE), in_map)],
            out_specs=pl.BlockSpec((_ACC_ROWS, _LANE), lambda p, j: (p, 0)),
        ),
        compiler_params=pltpu.CompilerParams(
            dimension_semantics=(lead_sem, pltpu.ARBITRARY),
            vmem_limit_bytes=_VMEM_LIMIT),
    )(x_slab, y_slab)
    return jnp.sum(out)   # tiny final reduce in plain XLA


def _sum_sq_diff(x, y):
    xf = x.reshape(-1)
    yf = y.reshape(-1)
    n = xf.shape[0]
    body = (n // _LANE) * _LANE
    total = jnp.float32(0.0)
    if body:
        if body == n:                              # zero-copy reshape (typical case)
            xs, ys = xf.reshape(-1, _LANE), yf.reshape(-1, _LANE)
        else:
            xs = lax.slice(xf, (0,), (body,)).reshape(-1, _LANE)
            ys = lax.slice(yf, (0,), (body,)).reshape(-1, _LANE)
        total = _sum_sq_diff_slab(xs, ys)
    if body != n:
        # TODO(synk): <128-element tail reduced in plain JAX; typical NCHW image
        # shapes (numel % 128 == 0) never take this path.
        dt = xf[body:].astype(jnp.float32) - yf[body:].astype(jnp.float32)
        total = total + jnp.sum(dt * dt)
    return total


# ------------------------- fused log-sum kernel (y & z likelihoods) -------------------------

def _make_fused_log_kernel(plan_y, plan_z, grid_len):
    # plan_i = (block_rows, n_blocks, valid_rows)

    def accumulate_log(ref, o_ref, out_base, j, block_rows, n_blocks, valid_rows):
        need_mask = (valid_rows != n_blocks * block_rows) or (n_blocks != grid_len)

        def compute(mask):
            x = ref[...].astype(jnp.float32)
            if mask is not None:
                x = jnp.where(mask, x, 1.0)         # log(1) = 0 neutral
            _accumulate(o_ref, jnp.log(x), block_rows, out_base)

        if not need_mask:
            compute(None)
        else:
            start = j * block_rows
            ragged = start + block_rows > valid_rows

            @pl.when(jnp.logical_not(ragged))
            def _():
                compute(None)

            @pl.when(ragged)
            def _():
                row = lax.broadcasted_iota(jnp.int32, (block_rows, _LANE), 0)
                compute(row + start < valid_rows)

    def kernel(y_ref, z_ref, o_ref):
        j = pl.program_id(0)

        @pl.when(j == 0)
        def _():
            o_ref[...] = jnp.zeros_like(o_ref)

        accumulate_log(y_ref, o_ref, 0, j, *plan_y)
        accumulate_log(z_ref, o_ref, _ACC_ROWS, j, *plan_z)

    return kernel


def _pad_lane_slab(x, pad_value):
    """Flatten to (rows, 128); likelihood tensors are tiny so the lane pad copy
    (only when numel % 128 != 0) is negligible."""
    flat = x.reshape(-1)
    rem = (-flat.shape[0]) % _LANE
    if rem:
        flat = jnp.concatenate(
            [flat, jnp.full((rem,), pad_value, dtype=flat.dtype)])
    return flat.reshape(-1, _LANE)


def _sum_logs(y_lik, z_lik):
    """Single pallas_call returning (sum(log(y)), sum(log(z)))."""
    ys = _pad_lane_slab(y_lik, 1)
    zs = _pad_lane_slab(z_lik, 1)
    by, ny = _plan_blocks(ys.shape[0], ys.dtype.itemsize)
    bz, nz = _plan_blocks(zs.shape[0], zs.dtype.itemsize)
    grid_len = max(ny, nz)
    kernel = _make_fused_log_kernel(
        (by, ny, ys.shape[0]), (bz, nz, zs.shape[0]), grid_len)

    out = pl.pallas_call(
        kernel,
        out_shape=jax.ShapeDtypeStruct((2 * _ACC_ROWS, _LANE), jnp.float32),
        grid_spec=pltpu.PrefetchScalarGridSpec(
            num_scalar_prefetch=0,
            grid=(grid_len,),
            in_specs=[
                pl.BlockSpec((by, _LANE), lambda j: (jnp.minimum(j, ny - 1), 0)),
                pl.BlockSpec((bz, _LANE), lambda j: (jnp.minimum(j, nz - 1), 0)),
            ],
            out_specs=pl.BlockSpec((2 * _ACC_ROWS, _LANE), lambda j: (0, 0)),
        ),
        compiler_params=pltpu.CompilerParams(
            dimension_semantics=(pltpu.ARBITRARY,),
            vmem_limit_bytes=_VMEM_LIMIT),
    )(ys, zs)
    return jnp.sum(out[:_ACC_ROWS]), jnp.sum(out[_ACC_ROWS:])


# ------------------------- loss wrapper -------------------------

@functools.partial(jax.jit, static_argnames=("only_dist",))
def _rate_distortion(x_hat, target, y_lik, z_lik, lmbda, only_dist):
    N, _, H, W = target.shape
    num_pixels = N * H * W
    out = {}
    out["mse_loss"] = _sum_sq_diff(x_hat, target) / x_hat.size
    distortion = (255.0 ** 2) * out["mse_loss"]
    denom = -math.log(2.0) * num_pixels
    sum_log_y, sum_log_z = _sum_logs(y_lik, z_lik)
    out["y_bpp"] = sum_log_y / denom
    out["z_bpp"] = sum_log_z / denom
    out["bpp_loss"] = out["y_bpp"] + out["z_bpp"]
    out["loss"] = distortion if only_dist else lmbda * distortion + out["bpp_loss"]
    return out


class RateDistortionLoss:
    """JAX/Pallas port of the PyTorch RateDistortionLoss (metric='mse')."""
    # TODO(synk): ms-ssim metric branch not implemented (mse only).
    # TODO(synk): forward-only; add a custom_vjp (analytic) if used for training.

    def __init__(self, lmbda=0.01, only_dist=False):
        self.lmbda = lmbda[0] if isinstance(lmbda, list) else lmbda
        self.only_dist = only_dist

    def __call__(self, output, target, lmbda=None):
        lmbda = self.lmbda if lmbda is None else lmbda
        return _rate_distortion(
            output["x_hat"], target,
            output["likelihoods"]["y"], output["likelihoods"]["z"],
            jnp.float32(lmbda), self.only_dist)


# ------------------------- demo / self-check -------------------------

def _reference(x_hat, target, y_lik, z_lik, lmbda):
    N, _, H, W = target.shape
    mse = jnp.mean((x_hat - target) ** 2)
    bpp = (jnp.sum(jnp.log(y_lik)) + jnp.sum(jnp.log(z_lik))) / (
        -math.log(2.0) * N * H * W)
    return mse, bpp, lmbda * (255.0 ** 2) * mse + bpp


def _check(loss_fn, x_hat, target, y_lik, z_lik, lmbda):
    out = loss_fn({"x_hat": x_hat, "likelihoods": {"y": y_lik, "z": z_lik}}, target)
    jax.block_until_ready(out["loss"])
    ref_mse, ref_bpp, ref_loss = _reference(x_hat, target, y_lik, z_lik, lmbda)
    assert jnp.allclose(out["mse_loss"], ref_mse, rtol=1e-5, atol=1e-6)
    assert jnp.allclose(out["bpp_loss"], ref_bpp, rtol=1e-5, atol=1e-6)
    assert jnp.allclose(out["loss"], ref_loss, rtol=1e-5, atol=1e-6)
    return out


if __name__ == "__main__":
    key = jax.random.PRNGKey(0)
    loss_fn = RateDistortionLoss(lmbda=0.01)

    # --- small case (single block, no mask) ---
    k1, k2, k3, k4, k5, k6, k7, k8 = jax.random.split(key, 8)
    N, C, H, W = 2, 3, 16, 16
    target = jax.random.uniform(k1, (N, C, H, W), dtype=jnp.float32)
    x_hat = jnp.clip(
        target + 0.05 * jax.random.normal(k2, (N, C, H, W), dtype=jnp.float32),
        0.0, 1.0)
    y_lik = jax.random.uniform(k3, (N, 8, H // 4, W // 4), dtype=jnp.float32,
                               minval=0.05, maxval=1.0)
    z_lik = jax.random.uniform(k4, (N, 4, H // 8, W // 8), dtype=jnp.float32,
                               minval=0.05, maxval=1.0)
    _check(loss_fn, x_hat, target, y_lik, z_lik, 0.01)

    # --- moderate case (multi-block grid + ragged last block mask path) ---
    N2, C2, H2, W2 = 2, 3, 320, 320
    target2 = jax.random.uniform(k5, (N2, C2, H2, W2), dtype=jnp.float32)
    x_hat2 = jnp.clip(
        target2 + 0.05 * jax.random.normal(k6, (N2, C2, H2, W2), dtype=jnp.float32),
        0.0, 1.0)
    y_lik2 = jax.random.uniform(k7, (N2, 8, H2 // 16, W2 // 16), dtype=jnp.float32,
                                minval=0.05, maxval=1.0)
    z_lik2 = jax.random.uniform(k8, (N2, 4, H2 // 32, W2 // 32), dtype=jnp.float32,
                                minval=0.05, maxval=1.0)
    _check(loss_fn, x_hat2, target2, y_lik2, z_lik2, 0.01)

    print("KERNEL_OK")
</pallas_src>

<mosaic_0001>
module attributes {stable_mosaic.version = 11 : i64} {
  func.func @kernel(%arg0: i32, %arg1: memref<2x128xf32, #tpu.memory_space<vmem>>, %arg2: memref<1x128xf32, #tpu.memory_space<vmem>>, %arg3: memref<64x128xf32, #tpu.memory_space<vmem>>) attributes {dimension_semantics = [#tpu.dimension_semantics<arbitrary>], iteration_bounds = array<i64: 1>, scalar_prefetch = 0 : i64, scratch_operands = 0 : i64, tpu.core_type = #tpu.core_type<tc>, window_params = [{transform_indices = @transform_0, window_bounds = array<i64: 2, 128>}, {transform_indices = @transform_1, window_bounds = array<i64: 1, 128>}, {pipeline_mode = #tpu.pipeline_mode<synchronous>, transform_indices = @transform_2, window_bounds = array<i64: 64, 128>}]} {
    %c0_i32 = arith.constant 0 : i32
    %0 = arith.cmpi eq, %arg0, %c0_i32 : i32
    %1 = arith.extui %0 : i1 to i32
    %c0_i32_0 = arith.constant 0 : i32
    %2 = arith.cmpi ne, %1, %c0_i32_0 : i32
    scf.if %2 {
      %cst_12 = arith.constant 0.000000e+00 : f32
      %17 = vector.broadcast %cst_12 : f32 to vector<64x128xf32>
      %c0_13 = arith.constant 0 : index
      %c0_14 = arith.constant 0 : index
      %18 = vector.load %arg3[%c0_13, %c0_14] : memref<64x128xf32, #tpu.memory_space<vmem>>, vector<64x128xf32>
      tpu.vector_store %arg3[%c0_13, %c0_14], %17 {strides = array<i32>} : memref<64x128xf32, #tpu.memory_space<vmem>>, vector<64x128xf32>,
    } else {
    }
    %c0 = arith.constant 0 : index
    %c0_1 = arith.constant 0 : index
    %3 = vector.load %arg1[%c0, %c0_1] : memref<2x128xf32, #tpu.memory_space<vmem>>, vector<2x128xf32>
    %4 = math.log %3 : vector<2x128xf32>
    %c0_2 = arith.constant 0 : index
    %c0_3 = arith.constant 0 : index
    %5 = vector.load %arg3[%c0_2, %c0_3] : memref<64x128xf32, #tpu.memory_space<vmem>>, vector<1x128xf32>
    %cst = arith.constant dense<0.000000e+00> : vector<128xf32>
    %6 = vector.multi_reduction <add>, %4, %cst [0] : vector<2x128xf32> to vector<128xf32>
    %7 = vector.shape_cast %6 : vector<128xf32> to vector<1x128xf32>
    %8 = arith.addf %5, %7 : vector<1x128xf32>
    %c0_4 = arith.constant 0 : index
    %c0_5 = arith.constant 0 : index
    %9 = vector.load %arg3[%c0_4, %c0_5] : memref<64x128xf32, #tpu.memory_space<vmem>>, vector<1x128xf32>
    tpu.vector_store %arg3[%c0_4, %c0_5], %8 {strides = array<i32>} : memref<64x128xf32, #tpu.memory_space<vmem>>, vector<1x128xf32>,
    %c0_6 = arith.constant 0 : index
    %c0_7 = arith.constant 0 : index
    %10 = vector.load %arg2[%c0_6, %c0_7] : memref<1x128xf32, #tpu.memory_space<vmem>>, vector<1x128xf32>
    %11 = math.log %10 : vector<1x128xf32>
    %c32 = arith.constant 32 : index
    %c0_8 = arith.constant 0 : index
    %12 = vector.load %arg3[%c32, %c0_8] : memref<64x128xf32, #tpu.memory_space<vmem>>, vector<1x128xf32>
    %cst_9 = arith.constant dense<0.000000e+00> : vector<128xf32>
    %13 = vector.multi_reduction <add>, %11, %cst_9 [0] : vector<1x128xf32> to vector<128xf32>
    %14 = vector.shape_cast %13 : vector<128xf32> to vector<1x128xf32>
    %15 = arith.addf %12, %14 : vector<1x128xf32>
    %c32_10 = arith.constant 32 : index
    %c0_11 = arith.constant 0 : index
    %16 = vector.load %arg3[%c32_10, %c0_11] : memref<64x128xf32, #tpu.memory_space<vmem>>, vector<1x128xf32>
    tpu.vector_store %arg3[%c32_10, %c0_11], %15 {strides = array<i32>} : memref<64x128xf32, #tpu.memory_space<vmem>>, vector<1x128xf32>,
    return
  }
  func.func @transform_0(%arg0: i32) -> (i32, i32) {
    %c0_i32 = arith.constant 0 : i32
    %0 = arith.minsi %arg0, %c0_i32 : i32
    %c0_i32_0 = arith.constant 0 : i32
    %c0_i32_1 = arith.constant 0 : i32
    return %0, %c0_i32_0 : i32, i32
  }
  func.func @transform_1(%arg0: i32) -> (i32, i32) {
    %c0_i32 = arith.constant 0 : i32
    %0 = arith.minsi %arg0, %c0_i32 : i32
    %c0_i32_0 = arith.constant 0 : i32
    %c0_i32_1 = arith.constant 0 : i32
    return %0, %c0_i32_0 : i32, i32
  }
  func.func @transform_2(%arg0: i32) -> (i32, i32) {
    %c0_i32 = arith.constant 0 : i32
    %c0_i32_0 = arith.constant 0 : i32
    %c0_i32_1 = arith.constant 0 : i32
    return %c0_i32, %c0_i32_0 : i32, i32
  }
}

module attributes {stable_mosaic.version = 11 : i64} {
  func.func @kernel(%arg0: i32, %arg1: i32, %arg2: memref<12x128xf32, #tpu.memory_space<vmem>>, %arg3: memref<12x128xf32, #tpu.memory_space<vmem>>, %arg4: memref<32x128xf32, #tpu.memory_space<vmem>>) attributes {dimension_semantics = [#tpu.dimension_semantics<arbitrary>, #tpu.dimension_semantics<arbitrary>], iteration_bounds = array<i64: 1, 1>, scalar_prefetch = 0 : i64, scratch_operands = 0 : i64, tpu.core_type = #tpu.core_type<tc>, window_params = [{transform_indices = @transform_0, window_bounds = array<i64: 12, 128>}, {transform_indices = @transform_1, window_bounds = array<i64: 12, 128>}, {transform_indices = @transform_2, window_bounds = array<i64: 32, 128>}]} {
    %c0_i32 = arith.constant 0 : i32
    %0 = arith.cmpi eq, %arg1, %c0_i32 : i32
    %1 = arith.extui %0 : i1 to i32
    %c0_i32_0 = arith.constant 0 : i32
    %2 = arith.cmpi ne, %1, %c0_i32_0 : i32
    scf.if %2 {
      %cst_8 = arith.constant 0.000000e+00 : f32
      %12 = vector.broadcast %cst_8 : f32 to vector<32x128xf32>
      %c0_9 = arith.constant 0 : index
      %c0_10 = arith.constant 0 : index
      %13 = vector.load %arg4[%c0_9, %c0_10] : memref<32x128xf32, #tpu.memory_space<vmem>>, vector<32x128xf32>
      tpu.vector_store %arg4[%c0_9, %c0_10], %12 {strides = array<i32>} : memref<32x128xf32, #tpu.memory_space<vmem>>, vector<32x128xf32>,
    } else {
    }
    %c0 = arith.constant 0 : index
    %c0_1 = arith.constant 0 : index
    %3 = vector.load %arg2[%c0, %c0_1] : memref<12x128xf32, #tpu.memory_space<vmem>>, vector<12x128xf32>
    %c0_2 = arith.constant 0 : index
    %c0_3 = arith.constant 0 : index
    %4 = vector.load %arg3[%c0_2, %c0_3] : memref<12x128xf32, #tpu.memory_space<vmem>>, vector<12x128xf32>
    %5 = arith.subf %3, %4 : vector<12x128xf32>
    %6 = arith.mulf %5, %5 : vector<12x128xf32>
    %c0_4 = arith.constant 0 : index
    %c0_5 = arith.constant 0 : index
    %7 = vector.load %arg4[%c0_4, %c0_5] : memref<32x128xf32, #tpu.memory_space<vmem>>, vector<1x128xf32>
    %cst = arith.constant dense<0.000000e+00> : vector<128xf32>
    %8 = vector.multi_reduction <add>, %6, %cst [0] : vector<12x128xf32> to vector<128xf32>
    %9 = vector.shape_cast %8 : vector<128xf32> to vector<1x128xf32>
    %10 = arith.addf %7, %9 : vector<1x128xf32>
    %c0_6 = arith.constant 0 : index
    %c0_7 = arith.constant 0 : index
    %11 = vector.load %arg4[%c0_6, %c0_7] : memref<32x128xf32, #tpu.memory_space<vmem>>, vector<1x128xf32>
    tpu.vector_store %arg4[%c0_6, %c0_7], %10 {strides = array<i32>} : memref<32x128xf32, #tpu.memory_space<vmem>>, vector<1x128xf32>,
    return
  }
  func.func @transform_0(%arg0: i32, %arg1: i32) -> (i32, i32) {
    %c1_i32 = arith.constant 1 : i32
    %0 = arith.muli %arg0, %c1_i32 : i32
    %1 = arith.addi %0, %arg1 : i32
    %c0_i32 = arith.constant 0 : i32
    %2 = arith.minsi %1, %c0_i32 : i32
    %c0_i32_0 = arith.constant 0 : i32
    %c0_i32_1 = arith.constant 0 : i32
    return %2, %c0_i32_0 : i32, i32
  }
  func.func @transform_1(%arg0: i32, %arg1: i32) -> (i32, i32) {
    %c1_i32 = arith.constant 1 : i32
    %0 = arith.muli %arg0, %c1_i32 : i32
    %1 = arith.addi %0, %arg1 : i32
    %c0_i32 = arith.constant 0 : i32
    %2 = arith.minsi %1, %c0_i32 : i32
    %c0_i32_0 = arith.constant 0 : i32
    %c0_i32_1 = arith.constant 0 : i32
    return %2, %c0_i32_0 : i32, i32
  }
  func.func @transform_2(%arg0: i32, %arg1: i32) -> (i32, i32) {
    %c0_i32 = arith.constant 0 : i32
    %c0_i32_0 = arith.constant 0 : i32
    return %arg0, %c0_i32 : i32, i32
  }
}

</mosaic_0001>

<llo_original>
// kernel: _rate_distortion.3
$region0: #{_rate_distortion.3}
  #allocation0 [shape = 'u32[]', space=smem, size = 0x4, offset = 0x4, fixed_abs, tag = 'smem constant byte address 0x4 - core index']
  #allocation1 [shape = 'u32[144,128]{1,0:T(1,128)}', space=vmem, size = 0x12000, scoped, tag = 'internal scratch']
  %s0 = inlined_call_operand.vmem [shape: f32[2,128], index: 0, kind: input, shape index: {}]
  %s1 = inlined_call_operand.vmem [shape: f32[1,128], index: 1, kind: input, shape index: {}]
  %s2 = inlined_call_operand.vmem [shape: f32[64,128], index: 2, kind: output, shape index: {}]
  %s3 = sld [smem:[#allocation0]]
  $region22: #{_rate_distortion.3} parent=0
    _
  %s5 = ssub.s32 1, %s3
  %s6 = scalar_select 0, %s5, %s3
  // Predicated region
  $region2: #{_rate_distortion.3} parent=0 // pred_check
    _
  $region3: #{_rate_distortion.3} parent=0 // pred_check_branch
    %8 = sbr.rel (0) target = $region5
  $region4: #{_rate_distortion.3} parent=0 // pred_region
    _
  $region5: #{_rate_distortion.3} parent=0 // pred_fallthru
    _
  // Predicated region
  $region6: #{_rate_distortion.3} parent=0 // pred_check
    _
  $region7: #{_rate_distortion.3} parent=0 // pred_check_branch
    %10 = sbr.rel (0) target = $region9
  $region8: #{_rate_distortion.3} parent=0 // pred_region
    _
  $region9: #{_rate_distortion.3} parent=0 // pred_fallthru
    _
  %p11 = scmp.eq.s32.totalorder 0, 0
  // Predicated region
  $region10: #{_rate_distortion.3} parent=0 // pred_check
    %p12 = pneg %p11
  $region11: #{_rate_distortion.3} parent=0 // pred_check_branch
    %14 = sbr.rel (%p12) target = $region13
  $region12: #{_rate_distortion.3} parent=0 // pred_region
    %15 = vst [vmem:[%s2] sm:$0xff] 0.0
    %16 = vst [vmem:[%s2 + $0x8] sm:$0xff] 0.0
    %17 = vst [vmem:[%s2 + $0x10] sm:$0xff] 0.0
    %18 = vst [vmem:[%s2 + $0x18] sm:$0xff] 0.0
    %19 = vst [vmem:[%s2 + $0x20] sm:$0xff] 0.0
    %20 = vst [vmem:[%s2 + $0x28] sm:$0xff] 0.0
    %21 = vst [vmem:[%s2 + $0x30] sm:$0xff] 0.0
    %22 = vst [vmem:[%s2 + $0x38] sm:$0xff] 0.0
  $region13: #{_rate_distortion.3} parent=0 // pred_fallthru
    _
  %v23 = vld [vmem:[%s0] sm:$0x3]
  %v24 = vlog2.pop %v23
  %v25 = vmul.f32 %v24, 0.6931472
  %v26 = vld [vmem:[%s2] sm:$0x1]
  %vm27 = vcmask 1041408
  %v28 = vsel %vm27, %v25, 0.0
  %v29 = vrot.slane %v28, 4
  %v30 = vadd.f32 %v28, %v29
  %v31 = vrot.slane %v30, 2
  %v32 = vadd.f32 %v30, %v31
  %v33 = vrot.slane %v32, 1
  %v34 = vadd.f32 %v32, %v33
  %v35 = vadd.f32 %v26, %v34
  %36 = vst [vmem:[%s2] sm:$0x1] %v35
  %v37 = vld [vmem:[%s1] sm:$0x1]
  %v38 = vlog2.pop %v37
  %v39 = vmul.f32 %v38, 0.6931472
  %v40 = vld [vmem:[%s2 + $0x20] sm:$0x1]
  %v41 = vadd.f32 %v39, 0.0
  %v42 = vadd.f32 %v40, %v41
  %43 = vst [vmem:[%s2 + $0x20] sm:$0x1] %v42
  // Predicated region
  $region14: #{_rate_distortion.3} parent=0 // pred_check
    _
  $region15: #{_rate_distortion.3} parent=0 // pred_check_branch
    %45 = sbr.rel (0) target = $region17
  $region16: #{_rate_distortion.3} parent=0 // pred_region
    _
  $region17: #{_rate_distortion.3} parent=0 // pred_fallthru
    _
  // Predicated region
  $region18: #{_rate_distortion.3} parent=0 // pred_check
    _
  $region19: #{_rate_distortion.3} parent=0 // pred_check_branch
    %47 = sbr.rel (0) target = $region21
  $region20: #{_rate_distortion.3} parent=0 // pred_region
    _
  $region21: #{_rate_distortion.3} parent=0 // pred_fallthru
    _

// kernel: _rate_distortion.2
$region0: #{_rate_distortion.2}
  #allocation0 [shape = 'u32[]', space=smem, size = 0x4, offset = 0x4, fixed_abs, tag = 'smem constant byte address 0x4 - core index']
  #allocation1 [shape = 'u32[144,128]{1,0:T(1,128)}', space=vmem, size = 0x12000, scoped, tag = 'internal scratch']
  %s0 = inlined_call_operand.vmem [shape: f32[12,128], index: 0, kind: input, shape index: {}]
  %s1 = inlined_call_operand.vmem [shape: f32[12,128], index: 1, kind: input, shape index: {}]
  %s2 = inlined_call_operand.vmem [shape: f32[32,128], index: 2, kind: output, shape index: {}]
  %s3 = sld [smem:[#allocation0]]
  $region22: #{_rate_distortion.2} parent=0
    _
  %s5 = ssub.s32 1, %s3
  %s6 = scalar_select 0, %s5, %s3
  // Predicated region
  $region2: #{_rate_distortion.2} parent=0 // pred_check
    _
  $region3: #{_rate_distortion.2} parent=0 // pred_check_branch
    %8 = sbr.rel (0) target = $region5
  $region4: #{_rate_distortion.2} parent=0 // pred_region
    %s9 = sadd.s32 0, 0
    %p10 = scmp.lt.s32.totalorder %s9, 0
    %s11 = scalar_select %p10, %s9, 0
    %s12 = smul.u32 2, %s11
    %p13 = scmp.lt.s32.totalorder %s12, 1
    %s14 = scalar_select %p13, %s12, 1
    %s15 = smul.addr %s14, 8
    %s16 = scalar_lea.vmem %s0, %s15
    %s17 = sadd.s32 0, 0
    %p18 = scmp.lt.s32.totalorder %s17, 0
    %s19 = scalar_select %p18, %s17, 0
    %s20 = smul.u32 2, %s19
  $region5: #{_rate_distortion.2} parent=0 // pred_fallthru
    _
  // Predicated region
  $region6: #{_rate_distortion.2} parent=0 // pred_check
    _
  $region7: #{_rate_distortion.2} parent=0 // pred_check_branch
    %22 = sbr.rel (0) target = $region9
  $region8: #{_rate_distortion.2} parent=0 // pred_region
    %s23 = sadd.s32 0, 0
    %p24 = scmp.lt.s32.totalorder %s23, 0
    %s25 = scalar_select %p24, %s23, 0
    %s26 = smul.u32 2, %s25
    %p27 = scmp.lt.s32.totalorder %s26, 1
    %s28 = scalar_select %p27, %s26, 1
    %s29 = smul.addr %s28, 8
    %s30 = scalar_lea.vmem %s1, %s29
    %s31 = sadd.s32 0, 0
    %p32 = scmp.lt.s32.totalorder %s31, 0
    %s33 = scalar_select %p32, %s31, 0
    %s34 = smul.u32 2, %s33
  $region9: #{_rate_distortion.2} parent=0 // pred_fallthru
    _
  %s35 = sadd.s32 0, 0
  %p36 = scmp.lt.s32.totalorder %s35, 0
  %s37 = scalar_select %p36, %s35, 0
  %s38 = smul.u32 2, %s37
  %p39 = scmp.lt.s32.totalorder %s38, 1
  %s40 = scalar_select %p39, %s38, 1
  %s41 = smul.addr %s40, 8
  %s42 = scalar_lea.vmem %s0, %s41
  %s43 = sadd.s32 0, 0
  %p44 = scmp.lt.s32.totalorder %s43, 0
  %s45 = scalar_select %p44, %s43, 0
  %s46 = smul.u32 2, %s45
  %p47 = scmp.lt.s32.totalorder %s46, 1
  %s48 = scalar_select %p47, %s46, 1
  %s49 = smul.addr %s48, 8
  %s50 = scalar_lea.vmem %s1, %s49
  %s51 = sadd.s32 0, 0
  %p52 = scmp.lt.s32.totalorder %s51, 0
  %s53 = scalar_select %p52, %s51, 0
  %s54 = smul.u32 2, %s53
  %p55 = scmp.lt.s32.totalorder %s54, 1
  %s56 = scalar_select %p55, %s54, 1
  %s57 = smul.addr %s56, 8
  %s58 = scalar_lea.vmem %s0, %s57
  %s59 = sadd.s32 0, 0
  %p60 = scmp.lt.s32.totalorder %s59, 0
  %s61 = scalar_select %p60, %s59, 0
  %s62 = smul.u32 2, %s61
  %s63 = sadd.s32 0, 0
  %p64 = scmp.lt.s32.totalorder %s63, 0
  %s65 = scalar_select %p64, %s63, 0
  %s66 = smul.u32 2, %s65
  %p67 = scmp.lt.s32.totalorder %s66, 1
  %s68 = scalar_select %p67, %s66, 1
  %s69 = smul.addr %s68, 8
  %s70 = scalar_lea.vmem %s1, %s69
  %s71 = sadd.s32 0, 0
  %p72 = scmp.lt.s32.totalorder %s71, 0
  %s73 = scalar_select %p72, %s71, 0
  %s74 = smul.u32 2, %s73
  %p75 = scmp.eq.s32.totalorder 0, 0
  // Predicated region
  $region10: #{_rate_distortion.2} parent=0 // pred_check
    %p76 = pneg %p75
  $region11: #{_rate_distortion.2} parent=0 // pred_check_branch
    %78 = sbr.rel (%p76) target = $region13
  $region12: #{_rate_distortion.2} parent=0 // pred_region
    %79 = vst [vmem:[%s2] sm:$0xff] 0.0
    %80 = vst [vmem:[%s2 + $0x8] sm:$0xff] 0.0
    %81 = vst [vmem:[%s2 + $0x10] sm:$0xff] 0.0
    %82 = vst [vmem:[%s2 + $0x18] sm:$0xff] 0.0
  $region13: #{_rate_distortion.2} parent=0 // pred_fallthru
    _
  %v83 = vld [vmem:[%s58] sm:$0xff]
  %v84 = vld [vmem:[%s58 + $0x8] sm:$0xf]
  %v85 = vld [vmem:[%s70] sm:$0xff]
  %v86 = vld [vmem:[%s70 + $0x8] sm:$0xf]
  %v87 = vsub.f32 %v83, %v85
  %v88 = vsub.f32 %v84, %v86
  %v89 = vmul.f32 %v87, %v87
  %v90 = vmul.f32 %v88, %v88
  %v91 = vld [vmem:[%s2] sm:$0x1]
  %vm92 = vcmask 1043456
  %v93 = vsel %vm92, %v90, 0.0
  %v94 = vadd.f32 %v89, %v93
  %v95 = vrot.slane %v94, 4
  %v96 = vadd.f32 %v94, %v95
  %v97 = vrot.slane %v96, 2
  %v98 = vadd.f32 %v96, %v97
  %v99 = vrot.slane %v98, 1
  %v100 = vadd.f32 %v98, %v99
  %v101 = vadd.f32 %v91, %v100
  %102 = vst [vmem:[%s2] sm:$0x1] %v101
  // Predicated region
  $region14: #{_rate_distortion.2} parent=0 // pred_check
    _
  $region15: #{_rate_distortion.2} parent=0 // pred_check_branch
    %104 = sbr.rel (0) target = $region17
  $region16: #{_rate_distortion.2} parent=0 // pred_region
    _
  $region17: #{_rate_distortion.2} parent=0 // pred_fallthru
    _
  // Predicated region
  $region18: #{_rate_distortion.2} parent=0 // pred_check
    _
  $region19: #{_rate_distortion.2} parent=0 // pred_check_branch
    %106 = sbr.rel (0) target = $region21
  $region20: #{_rate_distortion.2} parent=0 // pred_region
    _
  $region21: #{_rate_distortion.2} parent=0 // pred_fallthru
    _

</llo_original>
